<compile_context>
chip_gen: v7x
topology: tpu7x:2x2x1
jax: 0.10.0
libtpu: 0.0.40
codegen_flags: <defaults>
</compile_context>

<pallas_src>
import jax
import jax.numpy as jnp
from jax.experimental import pallas as pl
from jax.experimental.pallas import tpu as pltpu  # noqa: F401

BN_EPS = 1e-5


def _fused_scale_conv_bn_kernel(x_ref, s_ref, w_ref, gb_ref, o_ref):
    # x_ref : [Cin, M]    bf16 activations, channels-first (free view of NCHW, N==1)
    # s_ref : [1, Cin]    f32 per-channel multiplier (x39 squeezed)
    # w_ref : [Cout, Cin] f32 1x1 conv weight
    # gb_ref: [Cout, 2]   f32 packed BN params: column 0 = gamma, column 1 = beta
    # o_ref : [Cout, M]   f32 output
    x = x_ref[...].astype(jnp.float32)                       # bf16 -> f32 in VMEM

    # Fold the SE scale into the (tiny) weight instead of scaling x over all M.
    w_scaled = w_ref[...] * s_ref[...]                        # [Cout, Cin]

    # 1x1 conv == matmul on the MXU, f32 accumulate.
    y = jnp.dot(w_scaled, x, preferred_element_type=jnp.float32)  # [Cout, M]

    # Training-mode (biased) BN stats over the M axis.  Two-pass, mean-shifted
    # variance avoids catastrophic cancellation; the extra traversal of y is
    # far under the 3 vld/cycle load budget.
    inv_m = 1.0 / y.shape[1]
    mean = jnp.sum(y, axis=1, keepdims=True) * inv_m          # [Cout, 1]
    diff = y - mean                                           # [Cout, M]
    var = jnp.sum(diff * diff, axis=1, keepdims=True) * inv_m # [Cout, 1]
    inv_std = jax.lax.rsqrt(var + BN_EPS)

    # Fused affine epilogue: o = (y - mean) * (gamma * inv_std) + beta.
    a = gb_ref[:, 0:1] * inv_std                              # [Cout, 1]
    b = gb_ref[:, 1:2]                                        # [Cout, 1]
    o_ref[...] = (diff * a + b).astype(o_ref.dtype)


def fused_scale_conv1x1_bn(x_nchw, scale_nc11, w_oihw, gamma, beta):
    """x_nchw: [N, Cin, H, W], scale_nc11: [N, Cin, 1, 1] (N must be 1, as in the
    reference module), w_oihw: [Cout, Cin, 1, 1], gamma/beta: [Cout].
    Returns [N, Cout, H, W] float32."""
    N, Cin, H, W = x_nchw.shape
    Cout = w_oihw.shape[0]
    assert N == 1, "per-sample SE scale fold + NCHW<->[Cout,M] free reshape require N == 1"
    M = N * H * W

    # Free reshapes only (no transposes).  x is narrowed to bf16 at the HBM
    # boundary; in a fused graph the producer would emit bf16 directly.
    x2d = x_nchw.reshape(Cin, M).astype(jnp.bfloat16)         # [Cin, M]
    s2d = scale_nc11.reshape(1, Cin).astype(jnp.float32)      # [1, Cin]
    w2d = w_oihw.reshape(Cout, Cin).astype(jnp.float32)       # [Cout, Cin]
    gb = jnp.stack([gamma, beta], axis=1).astype(jnp.float32) # [Cout, 2]

    bytes_accessed = (x2d.size * 2 + s2d.size * 4 + w2d.size * 4
                      + gb.size * 4 + Cout * M * 4)
    cost = pl.CostEstimate(
        flops=2 * Cout * Cin * M + 8 * Cout * M,   # matmul + BN stats/epilogue
        bytes_accessed=bytes_accessed,
        transcendentals=Cout,                      # rsqrt per output channel
    )

    out2d = pl.pallas_call(
        _fused_scale_conv_bn_kernel,
        out_shape=jax.ShapeDtypeStruct((Cout, M), jnp.float32),
        in_specs=[
            pl.BlockSpec((Cin, M), lambda: (0, 0)),
            pl.BlockSpec((1, Cin), lambda: (0, 0)),
            pl.BlockSpec((Cout, Cin), lambda: (0, 0)),
            pl.BlockSpec((Cout, 2), lambda: (0, 0)),
        ],
        out_specs=pl.BlockSpec((Cout, M), lambda: (0, 0)),
        cost_estimate=cost,
        # Single block: well within default scoped VMEM on v5e/v6e/v7x, and a
        # grid / core-parallel split would only add per-step & cross-core
        # overhead for this micro-sized, bandwidth-bound op.
    )(x2d, s2d, w2d, gb)

    # [Cout, M] is exactly NCHW for N == 1.
    return out2d.reshape(N, Cout, H, W)


def _reference(x_nchw, scale_nc11, w_oihw, gamma, beta):
    """Pure-JAX f32 reference mirroring the PyTorch forward (training-mode BN)."""
    xs = x_nchw * scale_nc11
    y = jax.lax.conv_general_dilated(
        xs, w_oihw, window_strides=(1, 1), padding="VALID",
        dimension_numbers=("NCHW", "OIHW", "NCHW"))
    mean = jnp.mean(y, axis=(0, 2, 3), keepdims=True)
    var = jnp.mean((y - mean) ** 2, axis=(0, 2, 3), keepdims=True)
    yhat = (y - mean) * jax.lax.rsqrt(var + BN_EPS)
    return yhat * gamma.reshape(1, -1, 1, 1) + beta.reshape(1, -1, 1, 1)


if __name__ == "__main__":
    # Small shapes consistent with the module: channels fixed by the conv
    # (96 -> 24), spatial reduced from 56x56 to 16x16 (M = 256), batch 1.
    N, Cin, Cout, H, W = 1, 96, 24, 16, 16

    key = jax.random.PRNGKey(0)
    k_x, k_s, k_w, k_g, k_b = jax.random.split(key, 5)

    x34 = jax.random.normal(k_x, (N, Cin, H, W), dtype=jnp.float32)
    x39 = jax.random.normal(k_s, (N, Cin, 1, 1), dtype=jnp.float32)

    # Deterministic synthetic parameters (no checkpoint loading).
    conv_w = jax.random.normal(k_w, (Cout, Cin, 1, 1), dtype=jnp.float32) * (1.0 / jnp.sqrt(Cin))
    bn_gamma = 1.0 + 0.1 * jax.random.normal(k_g, (Cout,), dtype=jnp.float32)
    bn_beta = 0.1 * jax.random.normal(k_b, (Cout,), dtype=jnp.float32)

    out = jax.block_until_ready(fused_scale_conv1x1_bn(x34, x39, conv_w, bn_gamma, bn_beta))
    ref = jax.block_until_ready(_reference(x34, x39, conv_w, bn_gamma, bn_beta))

    assert out.shape == (N, Cout, H, W)
    # x is read in bf16 at the HBM boundary -> relaxed tolerance vs f32 reference.
    max_err = float(jnp.max(jnp.abs(out - ref)))
    assert jnp.allclose(out, ref, atol=3e-2, rtol=3e-2), max_err

    print("KERNEL_OK")
</pallas_src>

<mosaic_0001>
module attributes {stable_mosaic.version = 11 : i64} {
  func.func @_fused_scale_conv_bn_kernel(%arg0: memref<96x256xbf16, #tpu.memory_space<vmem>>, %arg1: memref<1x96xf32, #tpu.memory_space<vmem>>, %arg2: memref<24x96xf32, #tpu.memory_space<vmem>>, %arg3: memref<24x2xf32, #tpu.memory_space<vmem>>, %arg4: memref<24x256xf32, #tpu.memory_space<vmem>>) attributes {dimension_semantics = [], scalar_prefetch = 0 : i64, scratch_operands = 0 : i64, tpu.core_type = #tpu.core_type<tc>} {
    %c0 = arith.constant 0 : index
    %c0_0 = arith.constant 0 : index
    %0 = vector.load %arg0[%c0, %c0_0] : memref<96x256xbf16, #tpu.memory_space<vmem>>, vector<96x256xbf16>
    %1 = arith.extf %0 : vector<96x256xbf16> to vector<96x256xf32>
    %c0_1 = arith.constant 0 : index
    %c0_2 = arith.constant 0 : index
    %2 = vector.load %arg2[%c0_1, %c0_2] : memref<24x96xf32, #tpu.memory_space<vmem>>, vector<24x96xf32>
    %c0_3 = arith.constant 0 : index
    %c0_4 = arith.constant 0 : index
    %3 = vector.load %arg1[%c0_3, %c0_4] : memref<1x96xf32, #tpu.memory_space<vmem>>, vector<1x96xf32>
    %4 = vector.broadcast %3 : vector<1x96xf32> to vector<24x96xf32>
    %5 = arith.mulf %2, %4 : vector<24x96xf32>
    %cst = arith.constant dense<0.000000e+00> : vector<24x256xf32>
    %6 = tpu.matmul %5, %1, %cst {dimension_numbers = #tpu.dot_dimension_numbers<[1], [0], [0], [1], [0, 0, 1, 1], [], []>} : vector<24x96xf32>, vector<96x256xf32>, vector<24x256xf32> -> vector<24x256xf32>
    %cst_5 = arith.constant dense<0.000000e+00> : vector<24xf32>
    %7 = vector.multi_reduction <add>, %6, %cst_5 [1] : vector<24x256xf32> to vector<24xf32>
    %8 = vector.shape_cast %7 : vector<24xf32> to vector<24x1xf32>
    %cst_6 = arith.constant 3.906250e-03 : f32
    %9 = vector.broadcast %cst_6 : f32 to vector<24x1xf32>
    %10 = arith.mulf %8, %9 : vector<24x1xf32>
    %11 = vector.broadcast %10 : vector<24x1xf32> to vector<24x256xf32>
    %12 = arith.subf %6, %11 : vector<24x256xf32>
    %13 = arith.mulf %12, %12 : vector<24x256xf32>
    %cst_7 = arith.constant dense<0.000000e+00> : vector<24xf32>
    %14 = vector.multi_reduction <add>, %13, %cst_7 [1] : vector<24x256xf32> to vector<24xf32>
    %15 = vector.shape_cast %14 : vector<24xf32> to vector<24x1xf32>
    %cst_8 = arith.constant 3.906250e-03 : f32
    %16 = vector.broadcast %cst_8 : f32 to vector<24x1xf32>
    %17 = arith.mulf %15, %16 : vector<24x1xf32>
    %cst_9 = arith.constant 9.99999974E-6 : f32
    %18 = vector.broadcast %cst_9 : f32 to vector<24x1xf32>
    %19 = arith.addf %17, %18 : vector<24x1xf32>
    %20 = math.rsqrt %19 : vector<24x1xf32>
    %c0_10 = arith.constant 0 : index
    %c0_11 = arith.constant 0 : index
    %21 = vector.load %arg3[%c0_10, %c0_11] : memref<24x2xf32, #tpu.memory_space<vmem>>, vector<24x1xf32>
    %22 = arith.mulf %21, %20 : vector<24x1xf32>
    %c0_12 = arith.constant 0 : index
    %c1 = arith.constant 1 : index
    %23 = vector.load %arg3[%c0_12, %c1] : memref<24x2xf32, #tpu.memory_space<vmem>>, vector<24x1xf32>
    %24 = vector.broadcast %22 : vector<24x1xf32> to vector<24x256xf32>
    %25 = arith.mulf %12, %24 : vector<24x256xf32>
    %26 = vector.broadcast %23 : vector<24x1xf32> to vector<24x256xf32>
    %27 = arith.addf %25, %26 : vector<24x256xf32>
    %c0_13 = arith.constant 0 : index
    %c0_14 = arith.constant 0 : index
    %28 = vector.load %arg4[%c0_13, %c0_14] : memref<24x256xf32, #tpu.memory_space<vmem>>, vector<24x256xf32>
    tpu.vector_store %arg4[%c0_13, %c0_14], %27 {strides = array<i32>} : memref<24x256xf32, #tpu.memory_space<vmem>>, vector<24x256xf32>,
    return
  }
}

</mosaic_0001>

<llo_original>
// kernel: tpu_custom_call.1
$region0: #{tpu_custom_call.1}
  #allocation0 [shape = 'u32[]', space=smem, size = 0x4, offset = 0x4, fixed_abs, tag = 'smem constant byte address 0x4 - core index']
  #allocation1 [shape = 'u32[144,128]{1,0:T(1,128)}', space=vmem, size = 0x12000, scoped, tag = 'internal scratch']
  %s0 = inlined_call_operand.hbm [shape: bf16[96,256], index: 0, kind: input, shape index: {}]
  %s1 = inlined_call_operand.vmem [shape: f32[1,96], index: 1, kind: input, shape index: {}]
  %s2 = inlined_call_operand.vmem [shape: f32[24,96], index: 2, kind: input, shape index: {}]
  %s3 = inlined_call_operand.vmem [shape: f32[24,2], index: 3, kind: input, shape index: {}]
  %s4 = inlined_call_operand.hbm [shape: f32[24,256], index: 4, kind: output, shape index: {}]
  %s5 = sld [smem:[#allocation0]]
  $region30: #{tpu_custom_call.1} parent=0
    _
  %s7 = ssub.s32 1, %s5
  %s8 = scalar_select 0, %s7, %s5
  $region1: #{tpu_custom_call.1} parent=0
    #allocation2 [shape = 'u8[49152]{0}', space=vmem, size = 0xc000, scoped, tag = 'input window, operand 0, single buffered']
    #allocation3 [shape = 's32[1]{0}', space=sflag, size = 0x4, scoped, tag = 'scoped memory for tpu_custom_call.1']
    #allocation4 [shape = 's32[1]{0}', space=sflag, size = 0x4, scoped, tag = 'scoped memory for tpu_custom_call.1']
    #allocation5 [shape = 'u8[24576]{0}', space=vmem, size = 0x6000, scoped, tag = 'output window, operand 0, single buffered']
    %9 = vsyncpa [#allocation3], 0
    %10 = vsyncpa [#allocation4], 0
    // Predicated region
    $region2: #{tpu_custom_call.1} parent=1 // pred_check
      _
    $region3: #{tpu_custom_call.1} parent=1 // pred_check_branch
      %12 = sbr.rel (0) target = $region5
    $region4: #{tpu_custom_call.1} parent=1 // pred_region
      %s14 = ssub.s32 1536, 1536
      %15 = vsyncadd [#allocation3], %s14
      %s16 = sshll.u32 [#allocation2], 4
      %s17 = int_to_ptr.vmem [resolvable:$true] %s16
      %22 = dma.hbm_to_vmem [thread:$0]  %s0, 1536, %s17, [#allocation3], 128, 128, 8
    $region5: #{tpu_custom_call.1} parent=1 // pred_fallthru
      _
    // Predicated region
    $region6: #{tpu_custom_call.1} parent=1 // pred_check
      _
    $region7: #{tpu_custom_call.1} parent=1 // pred_check_branch
      %24 = sbr.rel (0) target = $region9
    $region8: #{tpu_custom_call.1} parent=1 // pred_region
      _
    $region9: #{tpu_custom_call.1} parent=1 // pred_fallthru
      _
    // Predicated region
    $region10: #{tpu_custom_call.1} parent=1 // pred_check
      _
    $region11: #{tpu_custom_call.1} parent=1 // pred_check_branch
      %26 = sbr.rel (0) target = $region13
    $region12: #{tpu_custom_call.1} parent=1 // pred_region
      _
    $region13: #{tpu_custom_call.1} parent=1 // pred_fallthru
      _
    // Predicated region
    $region14: #{tpu_custom_call.1} parent=1 // pred_check
      _
    $region15: #{tpu_custom_call.1} parent=1 // pred_check_branch
      %28 = sbr.rel (0) target = $region17
    $region16: #{tpu_custom_call.1} parent=1 // pred_region
      _
    $region17: #{tpu_custom_call.1} parent=1 // pred_fallthru
      _
    // Predicated region
    $region18: #{tpu_custom_call.1} parent=1 // pred_check
      _
    $region19: #{tpu_custom_call.1} parent=1 // pred_check_branch
      %30 = sbr.rel (0) target = $region21
    $region20: #{tpu_custom_call.1} parent=1 // pred_region
      %31 = dma.done [#allocation3], 1536
    $region21: #{tpu_custom_call.1} parent=1 // pred_fallthru
      _
    %v32 = vld [vmem:[#allocation2] sm:$0xff]
    %v33 = vld [vmem:[#allocation2 + $0x8] sm:$0xff]
    %v34 = vld [vmem:[#allocation2 + $0x10] sm:$0xff]
    %v35 = vld [vmem:[#allocation2 + $0x18] sm:$0xff]
    %v36 = vld [vmem:[#allocation2 + $0x20] sm:$0xff]
    %v37 = vld [vmem:[#allocation2 + $0x28] sm:$0xff]
    %v38 = vld [vmem:[#allocation2 + $0x30] sm:$0xff]
    %v39 = vld [vmem:[#allocation2 + $0x38] sm:$0xff]
    %v40 = vld [vmem:[#allocation2 + $0x40] sm:$0xff]
    %v41 = vld [vmem:[#allocation2 + $0x48] sm:$0xff]
    %v42 = vld [vmem:[#allocation2 + $0x50] sm:$0xff]
    %v43 = vld [vmem:[#allocation2 + $0x58] sm:$0xff]
    %v44 = vunpack.c.l.bf16 %v32
    %v45 = vunpack.c.h.bf16 %v32
    %v46 = vunpack.c.l.bf16 %v33
    %v47 = vunpack.c.h.bf16 %v33
    %v48 = vunpack.c.l.bf16 %v34
    %v49 = vunpack.c.h.bf16 %v34
    %v50 = vunpack.c.l.bf16 %v35
    %v51 = vunpack.c.h.bf16 %v35
    %v52 = vunpack.c.l.bf16 %v36
    %v53 = vunpack.c.h.bf16 %v36
    %v54 = vunpack.c.l.bf16 %v37
    %v55 = vunpack.c.h.bf16 %v37
    %v56 = vunpack.c.l.bf16 %v38
    %v57 = vunpack.c.h.bf16 %v38
    %v58 = vunpack.c.l.bf16 %v39
    %v59 = vunpack.c.h.bf16 %v39
    %v60 = vunpack.c.l.bf16 %v40
    %v61 = vunpack.c.h.bf16 %v40
    %v62 = vunpack.c.l.bf16 %v41
    %v63 = vunpack.c.h.bf16 %v41
    %v64 = vunpack.c.l.bf16 %v42
    %v65 = vunpack.c.h.bf16 %v42
    %v66 = vunpack.c.l.bf16 %v43
    %v67 = vunpack.c.h.bf16 %v43
    %v68 = vld [vmem:[%s2] sm:$0xff]
    %v69 = vld [vmem:[%s2 + $0x8] sm:$0xff]
    %v70 = vld [vmem:[%s2 + $0x10] sm:$0xff]
    %v71 = vld [vmem:[%s1] sm:$0x1]
    %v73 = vlaneseq
    %v74 = vshrl.u32 %v73, 7
    %v75 = vsub.s32 0, %v74
    %v76 = vrot.slane %v71, %v75
    %v78 = vmul.f32 %v68, %v76
    %v79 = vmul.f32 %v69, %v76
    %v80 = vmul.f32 %v70, %v76
    %vm81 = vcmask 785408
    %v83 = vsel %vm81, %v78, 0
    %v86 = vsel %vm81, %v79, 0
    %v89 = vsel %vm81, %v80, 0
    %91 = vmatprep.subr.mxu0 %v45
    %92 = vmatpush1.msra.mxu0 %v44
    %93 = vmatprep.subr.mxu0 %v47
    %94 = vmatpush1.msra.mxu0 %v46
    %95 = vmatprep.subr.mxu0 %v49
    %96 = vmatpush1.msra.mxu0 %v48
    %97 = vmatprep.subr.mxu0 %v51
    %98 = vmatpush1.msra.mxu0 %v50
    %99 = vmatprep.subr.mxu0 %v53
    %100 = vmatpush1.msra.mxu0 %v52
    %101 = vmatprep.subr.mxu0 %v55
    %102 = vmatpush1.msra.mxu0 %v54
    %103 = vmatprep.subr.mxu0 %v57
    %104 = vmatpush1.msra.mxu0 %v56
    %105 = vmatprep.subr.mxu0 %v59
    %106 = vmatpush1.msra.mxu0 %v58
    %107 = vmatprep.subr.mxu0 %v61
    %108 = vmatpush1.msra.mxu0 %v60
    %109 = vmatprep.subr.mxu0 %v63
    %110 = vmatpush1.msra.mxu0 %v62
    %111 = vmatprep.subr.mxu0 %v65
    %112 = vmatpush1.msra.mxu0 %v64
    %113 = vmatprep.subr.mxu0 %v67
    %114 = vmatpush1.msra.mxu0 %v66
    %115 = vmatprep.subr.mxu0 0.0
    %116 = vmatpush1.msra.mxu0 0.0
    %117 = vmatprep.subr.mxu0 0.0
    %118 = vmatpush1.msra.mxu0 0.0
    %119 = vmatprep.subr.mxu0 0.0
    %120 = vmatpush1.msra.mxu0 0.0
    %121 = vmatprep.subr.mxu0 0.0
    %122 = vmatpush1.msra.mxu0 0.0
    %123 = vmatprep.subr.mxu0 0.0
    %124 = vmatpush1.msra.mxu0 0.0
    %125 = vmatprep.subr.mxu0 0.0
    %126 = vmatpush1.msra.mxu0 0.0
    %127 = vmatprep.subr.mxu0 0.0
    %128 = vmatpush1.msra.mxu0 0.0
    %129 = vmatprep.subr.mxu0 0.0
    %130 = vmatpush1.msra.mxu0 0.0
    %131 = vmatprep.subr.mxu0 0.0
    %132 = vmatpush1.msra.mxu0 0.0
    %133 = vmatprep.subr.mxu0 0.0
    %134 = vmatpush1.msra.mxu0 0.0
    %135 = vmatprep.subr.mxu0 0.0
    %136 = vmatpush1.msra.mxu0 0.0
    %137 = vmatprep.subr.mxu0 0.0
    %138 = vmatpush1.msra.mxu0 0.0
    %139 = vmatprep.subr.mxu0 0.0
    %140 = vmatpush1.msra.mxu0 0.0
    %141 = vmatprep.subr.mxu0 0.0
    %142 = vmatpush1.msra.mxu0 0.0
    %143 = vmatprep.subr.mxu0 0.0
    %144 = vmatpush1.msra.mxu0 0.0
    %145 = vmatprep.subr.mxu0 0.0
    %146 = vmatpush1.msra.mxu0 0.0
    %147 = vmatprep.subr.mxu0 0.0
    %148 = vmatpush1.msra.mxu0 0.0
    %149 = vmatprep.subr.mxu0 0.0
    %150 = vmatpush1.msra.mxu0 0.0
    %151 = vmatprep.subr.mxu0 0.0
    %152 = vmatpush1.msra.mxu0 0.0
    %153 = vmatprep.subr.mxu0 0.0
    %154 = vmatpush1.msra.mxu0 0.0
    %155 = vmatprep.mubr.f32.mxu0 0.0
    %156 = vmatmul.mubr.f32.gmra.mrb[0].mxu0 %v83
    %v157 = vpop.f32.mrb[0].mxu0
    %v158 = vadd.f32 0.0, %v157
    %v159 = vpop.f32.mrb[0].mxu0
    %v160 = vadd.f32 0.0, %v159
    %161 = vmatprep.mubr.f32.mxu0 0.0
    %162 = vmatmul.mubr.f32.gmra.mrb[0].mxu0 %v86
    %v163 = vpop.f32.mrb[0].mxu0
    %v164 = vadd.f32 0.0, %v163
    %v165 = vpop.f32.mrb[0].mxu0
    %v166 = vadd.f32 0.0, %v165
    %167 = vmatprep.mubr.f32.mxu0 0.0
    %168 = vmatmul.mubr.f32.gmra.mrb[0].mxu0 %v89
    %v169 = vpop.f32.mrb[0].mxu0
    %v170 = vadd.f32 0.0, %v169
    %v171 = vpop.f32.mrb[0].mxu0
    %v172 = vadd.f32 0.0, %v171
    %173 = vdwg.mxu0
    %v174 = vadd.f32 %v158, %v160
    %175 = vadd.xlane.f32.xlu0 %v174
    %v176 = vpop.xlane.xlu0 %175
    %v177 = vadd.f32 %v164, %v166
    %178 = vadd.xlane.f32.xlu0 %v177
    %v179 = vpop.xlane.xlu0 %178
    %v180 = vadd.f32 %v170, %v172
    %181 = vadd.xlane.f32.xlu0 %v180
    %v182 = vpop.xlane.xlu0 %181
    %v183 = vmul.f32 %v176, 0.00390625
    %v184 = vmul.f32 %v179, 0.00390625
    %v185 = vmul.f32 %v182, 0.00390625
    %v186 = vsub.f32 %v158, %v183
    %v187 = vsub.f32 %v160, %v183
    %v188 = vsub.f32 %v164, %v184
    %v189 = vsub.f32 %v166, %v184
    %v190 = vsub.f32 %v170, %v185
    %v191 = vsub.f32 %v172, %v185
    %v192 = vmul.f32 %v186, %v186
    %v193 = vmul.f32 %v187, %v187
    %v194 = vmul.f32 %v188, %v188
    %v195 = vmul.f32 %v189, %v189
    %v196 = vmul.f32 %v190, %v190
    %v197 = vmul.f32 %v191, %v191
    %v198 = vadd.f32 %v192, %v193
    %199 = vadd.xlane.f32.xlu0 %v198
    %v200 = vpop.xlane.xlu0 %199
    %v201 = vadd.f32 %v194, %v195
    %202 = vadd.xlane.f32.xlu0 %v201
    %v203 = vpop.xlane.xlu0 %202
    %v204 = vadd.f32 %v196, %v197
    %205 = vadd.xlane.f32.xlu0 %v204
    %v206 = vpop.xlane.xlu0 %205
    %v207 = vmul.f32 %v200, 0.00390625
    %v208 = vmul.f32 %v203, 0.00390625
    %v209 = vmul.f32 %v206, 0.00390625
    %v210 = vadd.f32 %v207, 1e-05
    %v211 = vadd.f32 %v208, 1e-05
    %v212 = vadd.f32 %v209, 1e-05
    %v213 = vrsqrt.pop %v210
    %v214 = vrsqrt.pop %v211
    %v215 = vrsqrt.pop %v212
    %v216 = vld [vmem:[%s3] sm:$0xff]
    %v217 = vld [vmem:[%s3 + $0x8] sm:$0xff]
    %v218 = vld [vmem:[%s3 + $0x10] sm:$0xff]
    %v219 = vmul.f32 %v216, %v213
    %v220 = vmul.f32 %v217, %v214
    %v221 = vmul.f32 %v218, %v215
    %223 = vset.pattern.permute.xlu0 0
    %224 = vperm.xlu0 %223, %v219
    %v225 = vpop.permute.xlu0 %224
    %228 = vset.pattern.permute.xlu0 0
    %229 = vperm.xlu0 %228, %v220
    %v230 = vpop.permute.xlu0 %229
    %233 = vset.pattern.permute.xlu0 0
    %234 = vperm.xlu0 %233, %v221
    %v235 = vpop.permute.xlu0 %234
    %v237 = vmul.f32 %v186, %v225
    %v238 = vmul.f32 %v187, %v225
    %v239 = vmul.f32 %v188, %v230
    %v240 = vmul.f32 %v189, %v230
    %v241 = vmul.f32 %v190, %v235
    %v242 = vmul.f32 %v191, %v235
    %244 = vset.pattern.permute.xlu0 1
    %245 = vperm.xlu0 %244, %v216
    %v246 = vpop.permute.xlu0 %245
    %249 = vset.pattern.permute.xlu0 1
    %250 = vperm.xlu0 %249, %v217
    %v251 = vpop.permute.xlu0 %250
    %254 = vset.pattern.permute.xlu0 1
    %255 = vperm.xlu0 %254, %v218
    %v256 = vpop.permute.xlu0 %255
    %v258 = vadd.f32 %v237, %v246
    %v259 = vadd.f32 %v238, %v246
    %v260 = vadd.f32 %v239, %v251
    %v261 = vadd.f32 %v240, %v251
    %v262 = vadd.f32 %v241, %v256
    %v263 = vadd.f32 %v242, %v256
    %264 = vst [vmem:[#allocation5] sm:$0xff] %v258
    %265 = vst [vmem:[#allocation5 + $0x8] sm:$0xff] %v259
    %266 = vst [vmem:[#allocation5 + $0x10] sm:$0xff] %v260
    %267 = vst [vmem:[#allocation5 + $0x18] sm:$0xff] %v261
    %268 = vst [vmem:[#allocation5 + $0x20] sm:$0xff] %v262
    %269 = vst [vmem:[#allocation5 + $0x28] sm:$0xff] %v263
    // Predicated region
    $region22: #{tpu_custom_call.1} parent=1 // pred_check
      _
    $region23: #{tpu_custom_call.1} parent=1 // pred_check_branch
      %271 = sbr.rel (0) target = $region25
    $region24: #{tpu_custom_call.1} parent=1 // pred_region
      %s273 = ssub.s32 768, 768
      %274 = vsyncadd [#allocation4], %s273
      %s275 = sshll.u32 [#allocation5], 4
      %s276 = int_to_ptr.vmem [resolvable:$true] %s275
      %281 = dma.vmem_to_hbm [thread:$0]  %s276, 768, %s4, [#allocation4], 256, 256, 16
    $region25: #{tpu_custom_call.1} parent=1 // pred_fallthru
      _
    // Predicated region
    $region26: #{tpu_custom_call.1} parent=1 // pred_check
      _
    $region27: #{tpu_custom_call.1} parent=1 // pred_check_branch
      %283 = sbr.rel (0) target = $region29
    $region28: #{tpu_custom_call.1} parent=1 // pred_region
      %284 = dma.done [#allocation4], 768
    $region29: #{tpu_custom_call.1} parent=1 // pred_fallthru
      _
    %285 = vsyncpa [#allocation3], 1
    %286 = vsyncpa [#allocation4], 1

</llo_original>
